<compile_context>
chip_gen: v5e
topology: v5e:2x2
jax: 0.10.0
libtpu: 0.0.40
codegen_flags: <defaults>
</compile_context>

<pallas_src>
import numpy as np
import jax
import jax.numpy as jnp
from jax.experimental import pallas as pl
from jax.experimental.pallas import tpu as pltpu


# ----------------------------- Pallas kernel -------------------------------- #

def _neg_scale_kernel(neg_alpha_ref, g_ref, o_ref):
    # backward: grad_input = grad_output * (-alpha)
    na = neg_alpha_ref[0]                      # scalar from SMEM (already negated)
    o_ref[...] = (g_ref[...].astype(jnp.float32) * na).astype(o_ref.dtype)


# --------------------------- tiling / layout plan ---------------------------- #

_LANE = 128
_SUBLANE = 8
_MAX_BLOCK_BYTES = 4 * 1024 * 1024   # per block; in+out double-buffered => <=16 MiB VMEM
_MAX_COLS = 8192


def _plan_2d(n, itemsize):
    """Choose (cols, padded_rows, row_tile) for a lane-dense 2D view of n elems."""
    # Wide, lane-dense column count (multiple of 128).
    cols = _LANE
    while cols < _MAX_COLS and n >= (cols * 2) * _SUBLANE:
        cols *= 2
    rows = pl.cdiv(n, cols)
    # Row tile: multiple of 8, block capped at _MAX_BLOCK_BYTES.
    tr_cap = max(_SUBLANE, (_MAX_BLOCK_BYTES // (cols * itemsize)) // _SUBLANE * _SUBLANE)
    tr = min(tr_cap, pl.cdiv(rows, _SUBLANE) * _SUBLANE)
    rows_padded = pl.cdiv(rows, tr) * tr
    return cols, rows_padded, tr


# --------------------------- backward Pallas wrapper ------------------------- #

def _pallas_neg_scale(g, alpha):
    """Return -alpha * g via a single lane-dense Pallas elementwise kernel."""
    n = g.size
    itemsize = jnp.dtype(g.dtype).itemsize
    cols, rows_p, tr = _plan_2d(n, itemsize)
    total = rows_p * cols

    g_flat = g.reshape(-1)
    if total != n:
        # Pad to a full grid of (tr, cols) blocks -> unmasked, aligned stores.
        g_flat = jnp.pad(g_flat, (0, total - n))
    g2d = g_flat.reshape(rows_p, cols)

    # Fold the negation into the scalar so the body is a single multiply.
    neg_alpha = (-jnp.asarray(alpha, jnp.float32)).reshape(1)

    grid = (rows_p // tr,)
    out2d = pl.pallas_call(
        _neg_scale_kernel,
        out_shape=jax.ShapeDtypeStruct((rows_p, cols), g.dtype),
        grid=grid,
        in_specs=[
            pl.BlockSpec(memory_space=pltpu.SMEM),          # scalar (-alpha)
            pl.BlockSpec((tr, cols), lambda i: (i, 0)),     # grad tile
        ],
        out_specs=pl.BlockSpec((tr, cols), lambda i: (i, 0)),
        input_output_aliases={1: 0},                        # donate grad buffer
        compiler_params=pltpu.CompilerParams(
            dimension_semantics=("parallel",),
            vmem_limit_bytes=48 * 1024 * 1024,
        ),
        cost_estimate=pl.CostEstimate(
            flops=total,
            transcendentals=0,
            bytes_accessed=2 * total * itemsize,
        ),
    )(neg_alpha, g2d)

    out = out2d.reshape(-1)
    if total != n:
        out = out[:n]
    return out.reshape(g.shape)


# ------------------------ custom_vjp gradient reversal ----------------------- #

@jax.custom_vjp
def grad_rev(x, alpha):
    # Forward is an exact identity; no kernel / no copy needed.
    return x


def _grad_rev_fwd(x, alpha):
    return x, jnp.asarray(alpha, jnp.float32)


def _grad_rev_bwd(alpha, g):
    # grad wrt x = -alpha * g ; alpha gets a zero cotangent.
    return _pallas_neg_scale(g, alpha), jnp.zeros_like(alpha)


grad_rev.defvjp(_grad_rev_fwd, _grad_rev_bwd)


# ------------------------------ module wrapper ------------------------------- #

class GradRevLayer:
    """Python-side replica of the PyTorch GradRevLayer state machine.

    forward_counter / lamda_mul / alpha bookkeeping stays in host Python
    (plain scalar state in the PyTorch module too); the tensor math
    (identity forward, -alpha*grad backward) is handled by grad_rev whose
    backward runs the Pallas kernel.
    """

    def __init__(self, lamda=0.1, max_alpha=0.5):
        self.lamda = lamda
        self.alpha = 0.0
        self.max_alpha = float(max_alpha)
        self.lamda_mul = 0
        self.forward_counter = 0
        self.update_frequency = 30

    def set_alpha(self):
        self.lamda_mul += 1
        self.alpha = min(
            self.max_alpha,
            2.0 / (1.0 + np.exp(-self.lamda * self.lamda_mul)) - 1.0,
        )

    def __call__(self, inputs):
        # TODO(synk): under jit/scan the host-updated alpha is frozen at trace
        # time; matches eager PyTorch only when called eagerly.
        if self.forward_counter % self.update_frequency == 0:
            self.set_alpha()
        self.forward_counter += 1
        return grad_rev(inputs, jnp.float32(self.alpha))


# ----------------------------------- main ------------------------------------ #

if __name__ == "__main__":
    key = jax.random.PRNGKey(0)
    # NCHW input, small shapes: batch=2, channels=4, spatial=16x16
    x = jax.random.normal(key, (2, 4, 16, 16), dtype=jnp.float32)

    layer = GradRevLayer(lamda=0.1, max_alpha=0.5)
    y = layer(x)
    y = jax.block_until_ready(y)

    # Forward must be identity.
    assert y.shape == x.shape and y.dtype == x.dtype
    np.testing.assert_allclose(np.asarray(y), np.asarray(x), rtol=0, atol=0)

    # Backward semantics: d/dx sum(grad_rev(x, alpha)) == -alpha * ones.
    alpha = jnp.float32(layer.alpha)
    g = jax.grad(lambda xx: jnp.sum(grad_rev(xx, alpha)))(x)
    g = jax.block_until_ready(g)
    np.testing.assert_allclose(
        np.asarray(g), -float(alpha) * np.ones_like(np.asarray(x)),
        rtol=1e-6, atol=1e-6)

    # Exercise the padded (unaligned) path as well: 3*5*7 = 105 elements.
    key2 = jax.random.PRNGKey(1)
    xu = jax.random.normal(key2, (3, 5, 7), dtype=jnp.float32)
    gu = jax.grad(lambda xx: jnp.sum(grad_rev(xx, alpha)))(xu)
    gu = jax.block_until_ready(gu)
    np.testing.assert_allclose(
        np.asarray(gu), -float(alpha) * np.ones_like(np.asarray(xu)),
        rtol=1e-6, atol=1e-6)

    print("KERNEL_OK")
</pallas_src>

<mosaic_0001>
module attributes {stable_mosaic.version = 11 : i64} {
  func.func @_neg_scale_kernel(%arg0: i32, %arg1: memref<1xf32, #tpu.memory_space<smem>>, %arg2: memref<8x256xf32, #tpu.memory_space<vmem>>, %arg3: memref<8x256xf32, #tpu.memory_space<vmem>>) attributes {dimension_semantics = [#tpu.dimension_semantics<parallel>], iteration_bounds = array<i64: 1>, scalar_prefetch = 0 : i64, scratch_operands = 0 : i64, tpu.core_type = #tpu.core_type<tc>, window_params = [{transform_indices = @transform_0, window_bounds = array<i64: 1>}, {transform_indices = @transform_1, window_bounds = array<i64: 8, 256>}, {transform_indices = @transform_2, window_bounds = array<i64: 8, 256>}]} {
    %c0 = arith.constant 0 : index
    %0 = memref.load %arg1[%c0] : memref<1xf32, #tpu.memory_space<smem>>
    %c0_0 = arith.constant 0 : index
    %c0_1 = arith.constant 0 : index
    %1 = vector.load %arg2[%c0_0, %c0_1] : memref<8x256xf32, #tpu.memory_space<vmem>>, vector<8x256xf32>
    %2 = vector.broadcast %0 : f32 to vector<8x256xf32>
    %3 = arith.mulf %1, %2 : vector<8x256xf32>
    %c0_2 = arith.constant 0 : index
    %c0_3 = arith.constant 0 : index
    %4 = vector.load %arg3[%c0_2, %c0_3] : memref<8x256xf32, #tpu.memory_space<vmem>>, vector<8x256xf32>
    tpu.vector_store %arg3[%c0_2, %c0_3], %3 {strides = array<i32>} : memref<8x256xf32, #tpu.memory_space<vmem>>, vector<8x256xf32>,
    return
  }
  func.func @transform_0(%arg0: i32) -> i32 {
    %c0_i32 = arith.constant 0 : i32
    %c0_i32_0 = arith.constant 0 : i32
    return %c0_i32 : i32
  }
  func.func @transform_1(%arg0: i32) -> (i32, i32) {
    %c0_i32 = arith.constant 0 : i32
    %c0_i32_0 = arith.constant 0 : i32
    return %arg0, %c0_i32 : i32, i32
  }
  func.func @transform_2(%arg0: i32) -> (i32, i32) {
    %c0_i32 = arith.constant 0 : i32
    %c0_i32_0 = arith.constant 0 : i32
    return %arg0, %c0_i32 : i32, i32
  }
}

</mosaic_0001>

<llo_original>
// kernel: tpu_custom_call.1
$region0: #{tpu_custom_call.1}
  #allocation0 [shape = 'u32[]', space=smem, size = 0x4, offset = 0x4, fixed_abs, tag = 'smem constant byte address 0x4 - core index']
  #allocation1 [shape = 'u32[72,128]{1,0:T(1,128)}', space=vmem, size = 0x9000, scoped, tag = 'internal scratch']
  #allocation2 [shape = 'f32[1]{0:T(128)S(6)}', space=smem, size = 0x200, scoped, tag = 'scoped memory for tpu_custom_call.1']
  %s0 = inlined_call_operand.<no memory space> [shape: f32[1], index: 0, kind: input, shape index: {}]
  %s1 = inlined_call_operand.hbm [shape: f32[8,256], index: 1, kind: input, shape index: {}, may-alias: {1,2}]
  %s2 = inlined_call_operand.hbm [shape: f32[8,256], index: 2, kind: output, shape index: {}, may-alias: {1,2}]
  %s3 = sld [smem:[#allocation0]]
  $region22: #{tpu_custom_call.1} parent=0
    _
  %s5 = ssub.s32 1, %s3
  %s6 = scalar_select 0, %s5, %s3
  %7 = sst [smem:[#allocation2]] %s0
  $region1: #{tpu_custom_call.1} parent=0
    #allocation3 [shape = 'u8[8192]{0}', space=vmem, size = 0x2000, scoped, tag = 'input window, operand 1, single buffered']
    #allocation4 [shape = 's32[1]{0}', space=sflag, size = 0x4, scoped, tag = 'scoped memory for tpu_custom_call.1']
    #allocation5 [shape = 's32[1]{0}', space=sflag, size = 0x4, scoped, tag = 'scoped memory for tpu_custom_call.1']
    #allocation6 [shape = 'u8[8192]{0}', space=vmem, size = 0x2000, scoped, tag = 'output window, operand 0, single buffered']
    %8 = vsyncpa [#allocation4], 0
    %9 = vsyncpa [#allocation5], 0
    // Predicated region
    $region2: #{tpu_custom_call.1} parent=1 // pred_check
      _
    $region3: #{tpu_custom_call.1} parent=1 // pred_check_branch
      %11 = sbr.rel (0) target = $region5
    $region4: #{tpu_custom_call.1} parent=1 // pred_region
      _
    $region5: #{tpu_custom_call.1} parent=1 // pred_fallthru
      _
    // Predicated region
    $region6: #{tpu_custom_call.1} parent=1 // pred_check
      _
    $region7: #{tpu_custom_call.1} parent=1 // pred_check_branch
      %13 = sbr.rel (0) target = $region9
    $region8: #{tpu_custom_call.1} parent=1 // pred_region
      %15 = vsyncadd [#allocation4], 0
      %s17 = sshll.u32 %s1, 4
      %s18 = int_to_ptr.hbm [resolvable:$true] %s17
      %s19 = sshll.u32 [#allocation3], 4
      %s20 = int_to_ptr.vmem [resolvable:$true] %s19
      %22 = dma.hbm_to_vmem [thread:$0]  %s18, 256, %s20, [#allocation4]
    $region9: #{tpu_custom_call.1} parent=1 // pred_fallthru
      _
    // Predicated region
    $region10: #{tpu_custom_call.1} parent=1 // pred_check
      _
    $region11: #{tpu_custom_call.1} parent=1 // pred_check_branch
      %24 = sbr.rel (0) target = $region13
    $region12: #{tpu_custom_call.1} parent=1 // pred_region
      %26 = dma.done [#allocation4], 256
    $region13: #{tpu_custom_call.1} parent=1 // pred_fallthru
      _
    %s27 = sld [smem:[#allocation2]]
    %v28 = vld [vmem:[#allocation3] sm:$0xff]
    %v29 = vld [vmem:[#allocation3 + $0x8] sm:$0xff]
    %v30 = vstv %s27
    %v31 = vmul.f32 %v28, %v30
    %v32 = vmul.f32 %v29, %v30
    %33 = vst [vmem:[#allocation6] sm:$0xff] %v31
    %34 = vst [vmem:[#allocation6 + $0x8] sm:$0xff] %v32
    // Predicated region
    $region14: #{tpu_custom_call.1} parent=1 // pred_check
      _
    $region15: #{tpu_custom_call.1} parent=1 // pred_check_branch
      %36 = sbr.rel (0) target = $region17
    $region16: #{tpu_custom_call.1} parent=1 // pred_region
      %38 = vsyncadd [#allocation5], 0
      %s40 = sshll.u32 [#allocation6], 4
      %s41 = int_to_ptr.vmem [resolvable:$true] %s40
      %s42 = sshll.u32 %s2, 4
      %s43 = int_to_ptr.hbm [resolvable:$true] %s42
      %45 = dma.vmem_to_hbm [thread:$0]  %s41, 256, %s43, [#allocation5]
    $region17: #{tpu_custom_call.1} parent=1 // pred_fallthru
      _
    // Predicated region
    $region18: #{tpu_custom_call.1} parent=1 // pred_check
      _
    $region19: #{tpu_custom_call.1} parent=1 // pred_check_branch
      %47 = sbr.rel (0) target = $region21
    $region20: #{tpu_custom_call.1} parent=1 // pred_region
      %49 = dma.done [#allocation5], 256
    $region21: #{tpu_custom_call.1} parent=1 // pred_fallthru
      _
    %50 = vsyncpa [#allocation4], 1
    %51 = vsyncpa [#allocation5], 1

</llo_original>
